<compile_context>
chip_gen: v7x
topology: tpu7x:2x2x1
jax: 0.10.0
libtpu: 0.0.40
codegen_flags: <defaults>
</compile_context>

<pallas_src>
import jax
import jax.numpy as jnp
from jax.experimental import pallas as pl
from jax.experimental.pallas import tpu as pltpu

LANE = 128        # lane width: padded hidden / padded w4 output width
BATCH_ALIGN = 16  # batch tile granularity (bf16 sublane-pack friendly)
MAX_TB = 512      # batch-tile cap (per review: sweep beyond 128 for large B)


def _round_up(n, m):
    return ((n + m - 1) // m) * m


def _choose_tb(b):
    """Pick the batch tile size.

    Small batches (< 256 rows): a single tile (grid=1), padded to 16 rows.
    Large batches: tiles that are multiples of 128, capped at MAX_TB, chosen so
    the grid has >= 2 steps (v7x: both TensorCores get work on the 'parallel'
    batch axis; v5e/v6e: big tiles amortize the ~0.35us per-step overhead).
    """
    b16 = _round_up(b, BATCH_ALIGN)
    if b16 < 2 * LANE:
        return b16
    half = (b16 // 2) // LANE * LANE   # largest 128-multiple giving >= 2 tiles
    return max(LANE, min(MAX_TB, half))


def _mlp_disc_kernel(x_ref, w1_ref, b1_ref, w2_ref, b2_ref,
                     w3_ref, b3_ref, w4_ref, b4_ref, o_ref):
    """Fused MLP: (Linear->ReLU) x3 -> Linear -> Sigmoid (dropout = identity).

    Matmuls run on the MXU with bf16 operands and f32 accumulation; bias add,
    ReLU (VPU) and sigmoid (EUP) stay in f32.  x may arrive as f32 (cast here
    on the VPU, a free slot under the x DMA) or already as bf16 (cast no-op).
    """
    x = x_ref[...].astype(jnp.bfloat16)

    h = jnp.dot(x, w1_ref[...],
                preferred_element_type=jnp.float32) + b1_ref[...]
    h = jnp.maximum(h, 0.0).astype(jnp.bfloat16)

    h = jnp.dot(h, w2_ref[...],
                preferred_element_type=jnp.float32) + b2_ref[...]
    h = jnp.maximum(h, 0.0).astype(jnp.bfloat16)

    h = jnp.dot(h, w3_ref[...],
                preferred_element_type=jnp.float32) + b3_ref[...]
    h = jnp.maximum(h, 0.0).astype(jnp.bfloat16)

    # Final layer stays on the MXU via 128-padded w4; only column 0 is real.
    logit = jnp.dot(h, w4_ref[...], preferred_element_type=jnp.float32)
    col = logit[:, :1] + b4_ref[...]          # (tb, 1) + (1, 1) scalar bias
    o_ref[...] = jax.nn.sigmoid(col)          # (tb, 1) f32 store (4 B/row)


def init_params(key, num_channels, image_dim, hidden_dim):
    """Logical (torch-shaped) f32 parameters.

    Weights are stored as (in_features, out_features); biases as (1, out)."""
    d_in = num_channels * image_dim * image_dim
    dims = [(d_in, hidden_dim), (hidden_dim, hidden_dim),
            (hidden_dim, hidden_dim), (hidden_dim, 1)]
    params = []
    for fan_in, fan_out in dims:
        kw, kb, key = jax.random.split(key, 3)
        bound = 1.0 / jnp.sqrt(fan_in)
        w = jax.random.uniform(kw, (fan_in, fan_out), jnp.float32, -bound, bound)
        bvec = jax.random.uniform(kb, (1, fan_out), jnp.float32, -bound, bound)
        params.extend([w, bvec])
    return tuple(params)


def prepare_params(params):
    """Zero-pad logical params to lane-dense shapes and cast matmul weights to
    bf16.  Zero padding is mathematically inert: padded hidden columns are 0
    after ReLU and multiply zero weight rows downstream; padded w4 columns are
    never read (the kernel slices column 0).  b4 stays (1, 1) f32."""
    w1, b1, w2, b2, w3, b3, w4, b4 = params
    d_in, hid = w1.shape
    d_in_p = _round_up(d_in, LANE)
    hid_p = _round_up(hid, LANE)

    def pad_w(w, rp, cp):
        r, c = w.shape
        return jnp.pad(w, ((0, rp - r), (0, cp - c))).astype(jnp.bfloat16)

    def pad_b(bb, cp):
        return jnp.pad(bb, ((0, 0), (0, cp - bb.shape[1]))).astype(jnp.float32)

    return (pad_w(w1, d_in_p, hid_p), pad_b(b1, hid_p),
            pad_w(w2, hid_p, hid_p), pad_b(b2, hid_p),
            pad_w(w3, hid_p, hid_p), pad_b(b3, hid_p),
            pad_w(w4, hid_p, LANE), b4.astype(jnp.float32))


def mlp_discriminator_forward(x_nchw, kparams):
    """x_nchw: (B, C, H, W) f32.  kparams: output of prepare_params.
    Returns (B, 1) f32 in (0, 1)."""
    w1, b1, w2, b2, w3, b3, w4, b4 = kparams
    b = x_nchw.shape[0]
    d_in = x_nchw.shape[1] * x_nchw.shape[2] * x_nchw.shape[3]
    d_in_p = w1.shape[0]

    tb = _choose_tb(b)
    b_pad = _round_up(b, tb)
    grid = (b_pad // tb,)

    # Flatten exactly like torch .view(B, -1).  If no padding is needed, pass
    # f32 straight through and cast to bf16 inside the kernel (halves the HBM
    # traffic on the dominant tensor).  Otherwise keep the fused pad+bf16 cast.
    x_flat = x_nchw.reshape(b, d_in)
    if (b_pad != b) or (d_in_p != d_in):
        x_flat = jnp.pad(
            x_flat, ((0, b_pad - b), (0, d_in_p - d_in))).astype(jnp.bfloat16)

    # Explicit VMEM budget: double-buffered x tile + (default-double-buffered)
    # weights/biases + output tile, plus headroom for in-kernel intermediates.
    x_bytes = 2 * tb * d_in_p * x_flat.dtype.itemsize
    w_bytes = 2 * sum(int(a.size) * a.dtype.itemsize for a in kparams)
    o_bytes = 2 * tb * 4
    vmem_limit = int(x_bytes + w_bytes + o_bytes + (8 << 20))

    def const(shape):
        # Constant index_map: weight/bias DMA'd into VMEM once, reused by all
        # batch tiles.
        return pl.BlockSpec(shape, lambda i: (0, 0))

    out = pl.pallas_call(
        _mlp_disc_kernel,
        out_shape=jax.ShapeDtypeStruct((b_pad, 1), jnp.float32),
        grid=grid,
        in_specs=[
            pl.BlockSpec((tb, d_in_p), lambda i: (i, 0)),   # x: tiled over batch
            const(w1.shape), const(b1.shape),
            const(w2.shape), const(b2.shape),
            const(w3.shape), const(b3.shape),
            const(w4.shape), const(b4.shape),
        ],
        out_specs=pl.BlockSpec((tb, 1), lambda i: (i, 0)),
        compiler_params=pltpu.CompilerParams(
            dimension_semantics=("parallel",),
            vmem_limit_bytes=vmem_limit),
    )(x_flat, w1, b1, w2, b2, w3, b3, w4, b4)

    # Un-pad: only the first B rows are real.
    return out[:b]


if __name__ == "__main__":
    # Small shapes consistent with the module: batch=2, channels=4, image 16x16,
    # hidden_dim=32.  Dropout rate irrelevant in eval mode (identity).
    B, C, IMG, HID = 2, 4, 16, 32

    key = jax.random.PRNGKey(0)
    kx, kp, kx2 = jax.random.split(key, 3)
    x = jax.random.normal(kx, (B, C, IMG, IMG), dtype=jnp.float32)

    params = init_params(kp, C, IMG, HID)       # logical f32 params
    kparams = prepare_params(params)            # padded bf16/f32 kernel params

    # Reference 1: same math as the kernel (bf16 operands, f32 accumulation).
    def ref_bf16(x, p):
        w1, b1, w2, b2, w3, b3, w4, b4 = p

        def lin(h, w, bb):
            return jnp.dot(h.astype(jnp.bfloat16), w.astype(jnp.bfloat16),
                           preferred_element_type=jnp.float32) + bb

        h = x.reshape(x.shape[0], -1)
        h = jnp.maximum(lin(h, w1, b1), 0.0)
        h = jnp.maximum(lin(h, w2, b2), 0.0)
        h = jnp.maximum(lin(h, w3, b3), 0.0)
        return jax.nn.sigmoid(lin(h, w4, b4))

    # Reference 2: full-f32 math (the PyTorch module's exact semantics).
    def ref_f32(x, p):
        w1, b1, w2, b2, w3, b3, w4, b4 = p
        h = x.reshape(x.shape[0], -1)
        h = jnp.maximum(h @ w1 + b1, 0.0)
        h = jnp.maximum(h @ w2 + b2, 0.0)
        h = jnp.maximum(h @ w3 + b3, 0.0)
        return jax.nn.sigmoid(h @ w4 + b4)

    # --- Small-batch path (grid=1, padded bf16 x tile) ---
    out = jax.block_until_ready(mlp_discriminator_forward(x, kparams))
    assert out.shape == (B, 1), out.shape
    assert bool(jnp.all((out > 0.0) & (out < 1.0))), "sigmoid output out of range"
    assert jnp.allclose(out, ref_bf16(x, params), atol=2e-4, rtol=2e-4), \
        "mismatch vs bf16 reference (small batch)"
    assert jnp.allclose(out, ref_f32(x, params), atol=3e-2, rtol=3e-2), \
        "mismatch vs f32 reference (small batch)"

    # --- Large-batch path (grid>=2, un-padded f32 x, in-kernel bf16 cast) ---
    B2 = 256
    x2 = jax.random.normal(kx2, (B2, C, IMG, IMG), dtype=jnp.float32)
    out2 = jax.block_until_ready(mlp_discriminator_forward(x2, kparams))
    assert out2.shape == (B2, 1), out2.shape
    assert jnp.allclose(out2, ref_bf16(x2, params), atol=2e-4, rtol=2e-4), \
        "mismatch vs bf16 reference (large batch)"
    assert jnp.allclose(out2, ref_f32(x2, params), atol=3e-2, rtol=3e-2), \
        "mismatch vs f32 reference (large batch)"

    print("KERNEL_OK")
</pallas_src>

<mosaic_0001>
module attributes {stable_mosaic.version = 11 : i64} {
  func.func @_mlp_disc_kernel(%arg0: i32, %arg1: memref<16x1024xbf16, #tpu.memory_space<vmem>>, %arg2: memref<1024x128xbf16, #tpu.memory_space<vmem>>, %arg3: memref<1x128xf32, #tpu.memory_space<vmem>>, %arg4: memref<128x128xbf16, #tpu.memory_space<vmem>>, %arg5: memref<1x128xf32, #tpu.memory_space<vmem>>, %arg6: memref<128x128xbf16, #tpu.memory_space<vmem>>, %arg7: memref<1x128xf32, #tpu.memory_space<vmem>>, %arg8: memref<128x128xbf16, #tpu.memory_space<vmem>>, %arg9: memref<1x1xf32, #tpu.memory_space<vmem>>, %arg10: memref<16x1xf32, #tpu.memory_space<vmem>>) attributes {dimension_semantics = [#tpu.dimension_semantics<parallel>], iteration_bounds = array<i64: 1>, scalar_prefetch = 0 : i64, scratch_operands = 0 : i64, tpu.core_type = #tpu.core_type<tc>, window_params = [{transform_indices = @transform_0, window_bounds = array<i64: 16, 1024>}, {pipeline_mode = #tpu.pipeline_mode<synchronous>, transform_indices = @transform_1, window_bounds = array<i64: 1024, 128>}, {pipeline_mode = #tpu.pipeline_mode<synchronous>, transform_indices = @transform_2, window_bounds = array<i64: 1, 128>}, {pipeline_mode = #tpu.pipeline_mode<synchronous>, transform_indices = @transform_3, window_bounds = array<i64: 128, 128>}, {pipeline_mode = #tpu.pipeline_mode<synchronous>, transform_indices = @transform_4, window_bounds = array<i64: 1, 128>}, {pipeline_mode = #tpu.pipeline_mode<synchronous>, transform_indices = @transform_5, window_bounds = array<i64: 128, 128>}, {pipeline_mode = #tpu.pipeline_mode<synchronous>, transform_indices = @transform_6, window_bounds = array<i64: 1, 128>}, {pipeline_mode = #tpu.pipeline_mode<synchronous>, transform_indices = @transform_7, window_bounds = array<i64: 128, 128>}, {pipeline_mode = #tpu.pipeline_mode<synchronous>, transform_indices = @transform_8, window_bounds = array<i64: 1, 1>}, {transform_indices = @transform_9, window_bounds = array<i64: 16, 1>}]} {
    %c0 = arith.constant 0 : index
    %c0_0 = arith.constant 0 : index
    %0 = vector.load %arg1[%c0, %c0_0] : memref<16x1024xbf16, #tpu.memory_space<vmem>>, vector<16x1024xbf16>
    %c0_1 = arith.constant 0 : index
    %c0_2 = arith.constant 0 : index
    %1 = vector.load %arg2[%c0_1, %c0_2] : memref<1024x128xbf16, #tpu.memory_space<vmem>>, vector<1024x128xbf16>
    %cst = arith.constant dense<0.000000e+00> : vector<16x128xf32>
    %2 = tpu.matmul %0, %1, %cst {dimension_numbers = #tpu.dot_dimension_numbers<[1], [0], [0], [1], [0, 0, 1, 1], [], []>} : vector<16x1024xbf16>, vector<1024x128xbf16>, vector<16x128xf32> -> vector<16x128xf32>
    %c0_3 = arith.constant 0 : index
    %c0_4 = arith.constant 0 : index
    %3 = vector.load %arg3[%c0_3, %c0_4] : memref<1x128xf32, #tpu.memory_space<vmem>>, vector<1x128xf32>
    %4 = vector.broadcast %3 : vector<1x128xf32> to vector<16x128xf32>
    %5 = arith.addf %2, %4 : vector<16x128xf32>
    %cst_5 = arith.constant 0.000000e+00 : f32
    %6 = vector.broadcast %cst_5 : f32 to vector<16x128xf32>
    %7 = arith.maximumf %5, %6 : vector<16x128xf32>
    %8 = arith.truncf %7 : vector<16x128xf32> to vector<16x128xbf16>
    %c0_6 = arith.constant 0 : index
    %c0_7 = arith.constant 0 : index
    %9 = vector.load %arg4[%c0_6, %c0_7] : memref<128x128xbf16, #tpu.memory_space<vmem>>, vector<128x128xbf16>
    %cst_8 = arith.constant dense<0.000000e+00> : vector<16x128xf32>
    %10 = tpu.matmul %8, %9, %cst_8 {dimension_numbers = #tpu.dot_dimension_numbers<[1], [0], [0], [1], [0, 0, 1, 1], [], []>} : vector<16x128xbf16>, vector<128x128xbf16>, vector<16x128xf32> -> vector<16x128xf32>
    %c0_9 = arith.constant 0 : index
    %c0_10 = arith.constant 0 : index
    %11 = vector.load %arg5[%c0_9, %c0_10] : memref<1x128xf32, #tpu.memory_space<vmem>>, vector<1x128xf32>
    %12 = vector.broadcast %11 : vector<1x128xf32> to vector<16x128xf32>
    %13 = arith.addf %10, %12 : vector<16x128xf32>
    %cst_11 = arith.constant 0.000000e+00 : f32
    %14 = vector.broadcast %cst_11 : f32 to vector<16x128xf32>
    %15 = arith.maximumf %13, %14 : vector<16x128xf32>
    %16 = arith.truncf %15 : vector<16x128xf32> to vector<16x128xbf16>
    %c0_12 = arith.constant 0 : index
    %c0_13 = arith.constant 0 : index
    %17 = vector.load %arg6[%c0_12, %c0_13] : memref<128x128xbf16, #tpu.memory_space<vmem>>, vector<128x128xbf16>
    %cst_14 = arith.constant dense<0.000000e+00> : vector<16x128xf32>
    %18 = tpu.matmul %16, %17, %cst_14 {dimension_numbers = #tpu.dot_dimension_numbers<[1], [0], [0], [1], [0, 0, 1, 1], [], []>} : vector<16x128xbf16>, vector<128x128xbf16>, vector<16x128xf32> -> vector<16x128xf32>
    %c0_15 = arith.constant 0 : index
    %c0_16 = arith.constant 0 : index
    %19 = vector.load %arg7[%c0_15, %c0_16] : memref<1x128xf32, #tpu.memory_space<vmem>>, vector<1x128xf32>
    %20 = vector.broadcast %19 : vector<1x128xf32> to vector<16x128xf32>
    %21 = arith.addf %18, %20 : vector<16x128xf32>
    %cst_17 = arith.constant 0.000000e+00 : f32
    %22 = vector.broadcast %cst_17 : f32 to vector<16x128xf32>
    %23 = arith.maximumf %21, %22 : vector<16x128xf32>
    %24 = arith.truncf %23 : vector<16x128xf32> to vector<16x128xbf16>
    %c0_18 = arith.constant 0 : index
    %c0_19 = arith.constant 0 : index
    %25 = vector.load %arg8[%c0_18, %c0_19] : memref<128x128xbf16, #tpu.memory_space<vmem>>, vector<128x128xbf16>
    %cst_20 = arith.constant dense<0.000000e+00> : vector<16x128xf32>
    %26 = tpu.matmul %24, %25, %cst_20 {dimension_numbers = #tpu.dot_dimension_numbers<[1], [0], [0], [1], [0, 0, 1, 1], [], []>} : vector<16x128xbf16>, vector<128x128xbf16>, vector<16x128xf32> -> vector<16x128xf32>
    %27 = vector.extract_strided_slice %26 {offsets = [0, 0], sizes = [16, 1], strides = [1, 1]} : vector<16x128xf32> to vector<16x1xf32>
    %c0_21 = arith.constant 0 : index
    %c0_22 = arith.constant 0 : index
    %28 = vector.load %arg9[%c0_21, %c0_22] : memref<1x1xf32, #tpu.memory_space<vmem>>, vector<1x1xf32>
    %29 = vector.broadcast %28 : vector<1x1xf32> to vector<16x1xf32>
    %30 = arith.addf %27, %29 : vector<16x1xf32>
    %31 = arith.negf %30 : vector<16x1xf32>
    %32 = math.exp %31 : vector<16x1xf32>
    %cst_23 = arith.constant 1.000000e+00 : f32
    %33 = vector.broadcast %cst_23 : f32 to vector<16x1xf32>
    %34 = arith.addf %33, %32 : vector<16x1xf32>
    %35 = arith.divf %33, %34 : vector<16x1xf32>
    %c0_24 = arith.constant 0 : index
    %c0_25 = arith.constant 0 : index
    %36 = vector.load %arg10[%c0_24, %c0_25] : memref<16x1xf32, #tpu.memory_space<vmem>>, vector<16x1xf32>
    tpu.vector_store %arg10[%c0_24, %c0_25], %35 {strides = array<i32>} : memref<16x1xf32, #tpu.memory_space<vmem>>, vector<16x1xf32>,
    return
  }
  func.func @transform_0(%arg0: i32) -> (i32, i32) {
    %c0_i32 = arith.constant 0 : i32
    %c0_i32_0 = arith.constant 0 : i32
    return %arg0, %c0_i32 : i32, i32
  }
  func.func @transform_1(%arg0: i32) -> (i32, i32) {
    %c0_i32 = arith.constant 0 : i32
    %c0_i32_0 = arith.constant 0 : i32
    %c0_i32_1 = arith.constant 0 : i32
    return %c0_i32, %c0_i32_0 : i32, i32
  }
  func.func @transform_2(%arg0: i32) -> (i32, i32) {
    %c0_i32 = arith.constant 0 : i32
    %c0_i32_0 = arith.constant 0 : i32
    %c0_i32_1 = arith.constant 0 : i32
    return %c0_i32, %c0_i32_0 : i32, i32
  }
  func.func @transform_3(%arg0: i32) -> (i32, i32) {
    %c0_i32 = arith.constant 0 : i32
    %c0_i32_0 = arith.constant 0 : i32
    %c0_i32_1 = arith.constant 0 : i32
    return %c0_i32, %c0_i32_0 : i32, i32
  }
  func.func @transform_4(%arg0: i32) -> (i32, i32) {
    %c0_i32 = arith.constant 0 : i32
    %c0_i32_0 = arith.constant 0 : i32
    %c0_i32_1 = arith.constant 0 : i32
    return %c0_i32, %c0_i32_0 : i32, i32
  }
  func.func @transform_5(%arg0: i32) -> (i32, i32) {
    %c0_i32 = arith.constant 0 : i32
    %c0_i32_0 = arith.constant 0 : i32
    %c0_i32_1 = arith.constant 0 : i32
    return %c0_i32, %c0_i32_0 : i32, i32
  }
  func.func @transform_6(%arg0: i32) -> (i32, i32) {
    %c0_i32 = arith.constant 0 : i32
    %c0_i32_0 = arith.constant 0 : i32
    %c0_i32_1 = arith.constant 0 : i32
    return %c0_i32, %c0_i32_0 : i32, i32
  }
  func.func @transform_7(%arg0: i32) -> (i32, i32) {
    %c0_i32 = arith.constant 0 : i32
    %c0_i32_0 = arith.constant 0 : i32
    %c0_i32_1 = arith.constant 0 : i32
    return %c0_i32, %c0_i32_0 : i32, i32
  }
  func.func @transform_8(%arg0: i32) -> (i32, i32) {
    %c0_i32 = arith.constant 0 : i32
    %c0_i32_0 = arith.constant 0 : i32
    %c0_i32_1 = arith.constant 0 : i32
    return %c0_i32, %c0_i32_0 : i32, i32
  }
  func.func @transform_9(%arg0: i32) -> (i32, i32) {
    %c0_i32 = arith.constant 0 : i32
    %c0_i32_0 = arith.constant 0 : i32
    return %arg0, %c0_i32 : i32, i32
  }
}

</mosaic_0001>

<llo_original>
// kernel: tpu_custom_call.1
$region0: #{tpu_custom_call.1}
  #allocation0 [shape = 'u32[]', space=smem, size = 0x4, offset = 0x4, fixed_abs, tag = 'smem constant byte address 0x4 - core index']
  #allocation1 [shape = 'u32[144,128]{1,0:T(1,128)}', space=vmem, size = 0x12000, scoped, tag = 'internal scratch']
  #allocation2 [shape = 'f32[1,1]{1,0:T(1,128)S(1)}', space=vmem, size = 0x200, scoped, tag = 'scoped memory for tpu_custom_call.1']
  %s0 = inlined_call_operand.hbm [shape: bf16[16,1024], index: 0, kind: input, shape index: {}]
  %s1 = inlined_call_operand.hbm [shape: bf16[1024,128], index: 1, kind: input, shape index: {}]
  %s2 = inlined_call_operand.vmem [shape: f32[1,128], index: 2, kind: input, shape index: {}]
  %s3 = inlined_call_operand.hbm [shape: bf16[128,128], index: 3, kind: input, shape index: {}]
  %s4 = inlined_call_operand.vmem [shape: f32[1,128], index: 4, kind: input, shape index: {}]
  %s5 = inlined_call_operand.hbm [shape: bf16[128,128], index: 5, kind: input, shape index: {}]
  %s6 = inlined_call_operand.vmem [shape: f32[1,128], index: 6, kind: input, shape index: {}]
  %s7 = inlined_call_operand.hbm [shape: bf16[128,128], index: 7, kind: input, shape index: {}]
  %s8 = inlined_call_operand.<no memory space> [shape: f32[1,1], index: 8, kind: input, shape index: {}]
  %s9 = inlined_call_operand.vmem [shape: f32[16,1], index: 9, kind: output, shape index: {}]
  %s10 = sld [smem:[#allocation0]]
  $region66: #{tpu_custom_call.1} parent=0
    _
  %s12 = ssub.s32 1, %s10
  %s13 = scalar_select 0, %s12, %s10
  %v14 = vstv %s8
  %15 = vst [vmem:[#allocation2] sm:$0x1] %v14
  $region1: #{tpu_custom_call.1} parent=0
    #allocation3 [shape = 'u8[32768]{0}', space=vmem, size = 0x8000, scoped, tag = 'input window, operand 0, single buffered']
    #allocation4 [shape = 's32[1]{0}', space=sflag, size = 0x4, scoped, tag = 'scoped memory for tpu_custom_call.1']
    #allocation5 [shape = 'u8[262144]{0}', space=vmem, size = 0x40000, scoped, tag = 'input window, operand 1, single buffered']
    #allocation6 [shape = 's32[1]{0}', space=sflag, size = 0x4, scoped, tag = 'scoped memory for tpu_custom_call.1']
    #allocation7 [shape = 'u8[32768]{0}', space=vmem, size = 0x8000, scoped, tag = 'input window, operand 3, single buffered']
    #allocation8 [shape = 'u8[32768]{0}', space=vmem, size = 0x8000, scoped, tag = 'input window, operand 5, single buffered']
    #allocation9 [shape = 's32[1]{0}', space=sflag, size = 0x4, scoped, tag = 'scoped memory for tpu_custom_call.1']
    #allocation10 [shape = 'u8[32768]{0}', space=vmem, size = 0x8000, scoped, tag = 'input window, operand 7, single buffered']
    %16 = vsyncpa [#allocation4], 0
    %17 = vsyncpa [#allocation6], 0
    %18 = vsyncpa [#allocation9], 0
    // Predicated region
    $region2: #{tpu_custom_call.1} parent=1 // pred_check
      _
    $region3: #{tpu_custom_call.1} parent=1 // pred_check_branch
      %20 = sbr.rel (0) target = $region5
    $region4: #{tpu_custom_call.1} parent=1 // pred_region
      %s22 = ssub.s32 1024, 1024
      %23 = vsyncadd [#allocation4], %s22
      %s24 = sshll.u32 [#allocation3], 4
      %s25 = int_to_ptr.vmem [resolvable:$true] %s24
      %30 = dma.hbm_to_vmem [thread:$0]  %s0, 1024, %s25, [#allocation4], 512, 512, 32
    $region5: #{tpu_custom_call.1} parent=1 // pred_fallthru
      _
    // Predicated region
    $region6: #{tpu_custom_call.1} parent=1 // pred_check
      _
    $region7: #{tpu_custom_call.1} parent=1 // pred_check_branch
      %32 = sbr.rel (0) target = $region9
    $region8: #{tpu_custom_call.1} parent=1 // pred_region
      %s34 = ssub.s32 8192, 8192
      %35 = vsyncadd [#allocation6], %s34
      %s36 = sshll.u32 [#allocation5], 4
      %s37 = int_to_ptr.vmem [resolvable:$true] %s36
      %42 = dma.hbm_to_vmem [thread:$0]  %s1, 8192, %s37, [#allocation6], 64, 64, 4
    $region9: #{tpu_custom_call.1} parent=1 // pred_fallthru
      _
    // Predicated region
    $region10: #{tpu_custom_call.1} parent=1 // pred_check
      _
    $region11: #{tpu_custom_call.1} parent=1 // pred_check_branch
      %44 = sbr.rel (0) target = $region13
    $region12: #{tpu_custom_call.1} parent=1 // pred_region
      _
    $region13: #{tpu_custom_call.1} parent=1 // pred_fallthru
      _
    // Predicated region
    $region14: #{tpu_custom_call.1} parent=1 // pred_check
      _
    $region15: #{tpu_custom_call.1} parent=1 // pred_check_branch
      %46 = sbr.rel (0) target = $region17
    $region16: #{tpu_custom_call.1} parent=1 // pred_region
      %s48 = ssub.s32 1024, 1024
      %49 = vsyncadd [#allocation6], %s48
      %s50 = sshll.u32 [#allocation7], 4
      %s51 = int_to_ptr.vmem [resolvable:$true] %s50
      %56 = dma.hbm_to_vmem [thread:$0]  %s3, 1024, %s51, [#allocation6], 64, 64, 4
    $region17: #{tpu_custom_call.1} parent=1 // pred_fallthru
      _
    // Predicated region
    $region18: #{tpu_custom_call.1} parent=1 // pred_check
      _
    $region19: #{tpu_custom_call.1} parent=1 // pred_check_branch
      %58 = sbr.rel (0) target = $region21
    $region20: #{tpu_custom_call.1} parent=1 // pred_region
      _
    $region21: #{tpu_custom_call.1} parent=1 // pred_fallthru
      _
    // Predicated region
    $region22: #{tpu_custom_call.1} parent=1 // pred_check
      _
    $region23: #{tpu_custom_call.1} parent=1 // pred_check_branch
      %60 = sbr.rel (0) target = $region25
    $region24: #{tpu_custom_call.1} parent=1 // pred_region
      %s62 = ssub.s32 1024, 1024
      %63 = vsyncadd [#allocation9], %s62
      %s64 = sshll.u32 [#allocation8], 4
      %s65 = int_to_ptr.vmem [resolvable:$true] %s64
      %70 = dma.hbm_to_vmem [thread:$0]  %s5, 1024, %s65, [#allocation9], 64, 64, 4
    $region25: #{tpu_custom_call.1} parent=1 // pred_fallthru
      _
    // Predicated region
    $region26: #{tpu_custom_call.1} parent=1 // pred_check
      _
    $region27: #{tpu_custom_call.1} parent=1 // pred_check_branch
      %72 = sbr.rel (0) target = $region29
    $region28: #{tpu_custom_call.1} parent=1 // pred_region
      _
    $region29: #{tpu_custom_call.1} parent=1 // pred_fallthru
      _
    // Predicated region
    $region30: #{tpu_custom_call.1} parent=1 // pred_check
      _
    $region31: #{tpu_custom_call.1} parent=1 // pred_check_branch
      %74 = sbr.rel (0) target = $region33
    $region32: #{tpu_custom_call.1} parent=1 // pred_region
      %s76 = ssub.s32 1024, 1024
      %77 = vsyncadd [#allocation9], %s76
      %s78 = sshll.u32 [#allocation10], 4
      %s79 = int_to_ptr.vmem [resolvable:$true] %s78
      %84 = dma.hbm_to_vmem [thread:$0]  %s7, 1024, %s79, [#allocation9], 64, 64, 4
    $region33: #{tpu_custom_call.1} parent=1 // pred_fallthru
      _
    // Predicated region
    $region34: #{tpu_custom_call.1} parent=1 // pred_check
      _
    $region35: #{tpu_custom_call.1} parent=1 // pred_check_branch
      %86 = sbr.rel (0) target = $region37
    $region36: #{tpu_custom_call.1} parent=1 // pred_region
      _
    $region37: #{tpu_custom_call.1} parent=1 // pred_fallthru
      _
    // Predicated region
    $region38: #{tpu_custom_call.1} parent=1 // pred_check
      _
    $region39: #{tpu_custom_call.1} parent=1 // pred_check_branch
      %88 = sbr.rel (0) target = $region41
    $region40: #{tpu_custom_call.1} parent=1 // pred_region
      %89 = dma.done [#allocation4], 1024
    $region41: #{tpu_custom_call.1} parent=1 // pred_fallthru
      _
    // Predicated region
    $region42: #{tpu_custom_call.1} parent=1 // pred_check
      _
    $region43: #{tpu_custom_call.1} parent=1 // pred_check_branch
      %91 = sbr.rel (0) target = $region45
    $region44: #{tpu_custom_call.1} parent=1 // pred_region
      %92 = dma.done [#allocation6], 8192
    $region45: #{tpu_custom_call.1} parent=1 // pred_fallthru
      _
    // Predicated region
    $region46: #{tpu_custom_call.1} parent=1 // pred_check
      _
    $region47: #{tpu_custom_call.1} parent=1 // pred_check_branch
      %94 = sbr.rel (0) target = $region49
    $region48: #{tpu_custom_call.1} parent=1 // pred_region
      %95 = dma.done [#allocation6], 1024
    $region49: #{tpu_custom_call.1} parent=1 // pred_fallthru
      _
    // Predicated region
    $region50: #{tpu_custom_call.1} parent=1 // pred_check
      _
    $region51: #{tpu_custom_call.1} parent=1 // pred_check_branch
      %97 = sbr.rel (0) target = $region53
    $region52: #{tpu_custom_call.1} parent=1 // pred_region
      %98 = dma.done [#allocation9], 1024
    $region53: #{tpu_custom_call.1} parent=1 // pred_fallthru
      _
    // Predicated region
    $region54: #{tpu_custom_call.1} parent=1 // pred_check
      _
    $region55: #{tpu_custom_call.1} parent=1 // pred_check_branch
      %100 = sbr.rel (0) target = $region57
    $region56: #{tpu_custom_call.1} parent=1 // pred_region
      %101 = dma.done [#allocation9], 1024
    $region57: #{tpu_custom_call.1} parent=1 // pred_fallthru
      _
    %v103 = vld [vmem:[#allocation3] sm:$0xff]
    %v104 = vld [vmem:[#allocation3 + $0x8] sm:$0xff]
    %v105 = vld [vmem:[#allocation3 + $0x10] sm:$0xff]
    %v106 = vld [vmem:[#allocation3 + $0x18] sm:$0xff]
    %v107 = vld [vmem:[#allocation3 + $0x20] sm:$0xff]
    %v108 = vld [vmem:[#allocation3 + $0x28] sm:$0xff]
    %v109 = vld [vmem:[#allocation3 + $0x30] sm:$0xff]
    %v110 = vld [vmem:[#allocation3 + $0x38] sm:$0xff]
    %v111 = vld [vmem:[#allocation5] sm:$0xf]
    %v112 = vld [vmem:[#allocation5 + $0x4] sm:$0xf]
    %v113 = vld [vmem:[#allocation5 + $0x8] sm:$0xf]
    %v114 = vld [vmem:[#allocation5 + $0xc] sm:$0xf]
    %v115 = vld [vmem:[#allocation5 + $0x10] sm:$0xf]
    %v116 = vld [vmem:[#allocation5 + $0x14] sm:$0xf]
    %v117 = vld [vmem:[#allocation5 + $0x18] sm:$0xf]
    %v118 = vld [vmem:[#allocation5 + $0x1c] sm:$0xf]
    %v119 = vld [vmem:[#allocation5 + $0x20] sm:$0xf]
    %v120 = vld [vmem:[#allocation5 + $0x24] sm:$0xf]
    %v121 = vld [vmem:[#allocation5 + $0x28] sm:$0xf]
    %v122 = vld [vmem:[#allocation5 + $0x2c] sm:$0xf]
    %v123 = vld [vmem:[#allocation5 + $0x30] sm:$0xf]
    %v124 = vld [vmem:[#allocation5 + $0x34] sm:$0xf]
    %v125 = vld [vmem:[#allocation5 + $0x38] sm:$0xf]
    %v126 = vld [vmem:[#allocation5 + $0x3c] sm:$0xf]
    %v127 = vld [vmem:[#allocation5 + $0x40] sm:$0xf]
    %v128 = vld [vmem:[#allocation5 + $0x44] sm:$0xf]
    %v129 = vld [vmem:[#allocation5 + $0x48] sm:$0xf]
    %v130 = vld [vmem:[#allocation5 + $0x4c] sm:$0xf]
    %v131 = vld [vmem:[#allocation5 + $0x50] sm:$0xf]
    %v132 = vld [vmem:[#allocation5 + $0x54] sm:$0xf]
    %v133 = vld [vmem:[#allocation5 + $0x58] sm:$0xf]
    %v134 = vld [vmem:[#allocation5 + $0x5c] sm:$0xf]
    %v135 = vld [vmem:[#allocation5 + $0x60] sm:$0xf]
    %v136 = vld [vmem:[#allocation5 + $0x64] sm:$0xf]
    %v137 = vld [vmem:[#allocation5 + $0x68] sm:$0xf]
    %v138 = vld [vmem:[#allocation5 + $0x6c] sm:$0xf]
    %v139 = vld [vmem:[#allocation5 + $0x70] sm:$0xf]
    %v140 = vld [vmem:[#allocation5 + $0x74] sm:$0xf]
    %v141 = vld [vmem:[#allocation5 + $0x78] sm:$0xf]
    %v142 = vld [vmem:[#allocation5 + $0x7c] sm:$0xf]
    %v143 = vld [vmem:[#allocation5 + $0x80] sm:$0xf]
    %v144 = vld [vmem:[#allocation5 + $0x84] sm:$0xf]
    %v145 = vld [vmem:[#allocation5 + $0x88] sm:$0xf]
    %v146 = vld [vmem:[#allocation5 + $0x8c] sm:$0xf]
    %v147 = vld [vmem:[#allocation5 + $0x90] sm:$0xf]
    %v148 = vld [vmem:[#allocation5 + $0x94] sm:$0xf]
    %v149 = vld [vmem:[#allocation5 + $0x98] sm:$0xf]
    %v150 = vld [vmem:[#allocation5 + $0x9c] sm:$0xf]
    %v151 = vld [vmem:[#allocation5 + $0xa0] sm:$0xf]
    %v152 = vld [vmem:[#allocation5 + $0xa4] sm:$0xf]
    %v153 = vld [vmem:[#allocation5 + $0xa8] sm:$0xf]
    %v154 = vld [vmem:[#allocation5 + $0xac] sm:$0xf]
    %v155 = vld [vmem:[#allocation5 + $0xb0] sm:$0xf]
    %v156 = vld [vmem:[#allocation5 + $0xb4] sm:$0xf]
    %v157 = vld [vmem:[#allocation5 + $0xb8] sm:$0xf]
    %v158 = vld [vmem:[#allocation5 + $0xbc] sm:$0xf]
    %v159 = vld [vmem:[#allocation5 + $0xc0] sm:$0xf]
    %v160 = vld [vmem:[#allocation5 + $0xc4] sm:$0xf]
    %v161 = vld [vmem:[#allocation5 + $0xc8] sm:$0xf]
    %v162 = vld [vmem:[#allocation5 + $0xcc] sm:$0xf]
    %v163 = vld [vmem:[#allocation5 + $0xd0] sm:$0xf]
    %v164 = vld [vmem:[#allocation5 + $0xd4] sm:$0xf]
    %v165 = vld [vmem:[#allocation5 + $0xd8] sm:$0xf]
    %v166 = vld [vmem:[#allocation5 + $0xdc] sm:$0xf]
    %v167 = vld [vmem:[#allocation5 + $0xe0] sm:$0xf]
    %v168 = vld [vmem:[#allocation5 + $0xe4] sm:$0xf]
    %v169 = vld [vmem:[#allocation5 + $0xe8] sm:$0xf]
    %v170 = vld [vmem:[#allocation5 + $0xec] sm:$0xf]
    %v171 = vld [vmem:[#allocation5 + $0xf0] sm:$0xf]
    %v172 = vld [vmem:[#allocation5 + $0xf4] sm:$0xf]
    %v173 = vld [vmem:[#allocation5 + $0xf8] sm:$0xf]
    %v174 = vld [vmem:[#allocation5 + $0xfc] sm:$0xf]
    %v175 = vld [vmem:[#allocation5 + $0x100] sm:$0xf]
    %v176 = vld [vmem:[#allocation5 + $0x104] sm:$0xf]
    %v177 = vld [vmem:[#allocation5 + $0x108] sm:$0xf]
    %v178 = vld [vmem:[#allocation5 + $0x10c] sm:$0xf]
    %v179 = vld [vmem:[#allocation5 + $0x110] sm:$0xf]
    %v180 = vld [vmem:[#allocation5 + $0x114] sm:$0xf]
    %v181 = vld [vmem:[#allocation5 + $0x118] sm:$0xf]
    %v182 = vld [vmem:[#allocation5 + $0x11c] sm:$0xf]
    %v183 = vld [vmem:[#allocation5 + $0x120] sm:$0xf]
    %v184 = vld [vmem:[#allocation5 + $0x124] sm:$0xf]
    %v185 = vld [vmem:[#allocation5 + $0x128] sm:$0xf]
    %v186 = vld [vmem:[#allocation5 + $0x12c] sm:$0xf]
    %v187 = vld [vmem:[#allocation5 + $0x130] sm:$0xf]
    %v188 = vld [vmem:[#allocation5 + $0x134] sm:$0xf]
    %v189 = vld [vmem:[#allocation5 + $0x138] sm:$0xf]
    %v190 = vld [vmem:[#allocation5 + $0x13c] sm:$0xf]
    %v191 = vld [vmem:[#allocation5 + $0x140] sm:$0xf]
    %v192 = vld [vmem:[#allocation5 + $0x144] sm:$0xf]
    %v193 = vld [vmem:[#allocation5 + $0x148] sm:$0xf]
    %v194 = vld [vmem:[#allocation5 + $0x14c] sm:$0xf]
    %v195 = vld [vmem:[#allocation5 + $0x150] sm:$0xf]
    %v196 = vld [vmem:[#allocation5 + $0x154] sm:$0xf]
    %v197 = vld [vmem:[#allocation5 + $0x158] sm:$0xf]
    %v198 = vld [vmem:[#allocation5 + $0x15c] sm:$0xf]
    %v199 = vld [vmem:[#allocation5 + $0x160] sm:$0xf]
    %v200 = vld [vmem:[#allocation5 + $0x164] sm:$0xf]
    %v201 = vld [vmem:[#allocation5 + $0x168] sm:$0xf]
    %v202 = vld [vmem:[#allocation5 + $0x16c] sm:$0xf]
    %v203 = vld [vmem:[#allocation5 + $0x170] sm:$0xf]
    %v204 = vld [vmem:[#allocation5 + $0x174] sm:$0xf]
    %v205 = vld [vmem:[#allocation5 + $0x178] sm:$0xf]
    %v206 = vld [vmem:[#allocation5 + $0x17c] sm:$0xf]
    %v207 = vld [vmem:[#allocation5 + $0x180] sm:$0xf]
    %v208 = vld [vmem:[#allocation5 + $0x184] sm:$0xf]
    %v209 = vld [vmem:[#allocation5 + $0x188] sm:$0xf]
    %v210 = vld [vmem:[#allocation5 + $0x18c] sm:$0xf]
    %v211 = vld [vmem:[#allocation5 + $0x190] sm:$0xf]
    %v212 = vld [vmem:[#allocation5 + $0x194] sm:$0xf]
    %v213 = vld [vmem:[#allocation5 + $0x198] sm:$0xf]
    %v214 = vld [vmem:[#allocation5 + $0x19c] sm:$0xf]
    %v215 = vld [vmem:[#allocation5 + $0x1a0] sm:$0xf]
    %v216 = vld [vmem:[#allocation5 + $0x1a4] sm:$0xf]
    %v217 = vld [vmem:[#allocation5 + $0x1a8] sm:$0xf]
    %v218 = vld [vmem:[#allocation5 + $0x1ac] sm:$0xf]
    %v219 = vld [vmem:[#allocation5 + $0x1b0] sm:$0xf]
    %v220 = vld [vmem:[#allocation5 + $0x1b4] sm:$0xf]
    %v221 = vld [vmem:[#allocation5 + $0x1b8] sm:$0xf]
    %v222 = vld [vmem:[#allocation5 + $0x1bc] sm:$0xf]
    %v223 = vld [vmem:[#allocation5 + $0x1c0] sm:$0xf]
    %v224 = vld [vmem:[#allocation5 + $0x1c4] sm:$0xf]
    %v225 = vld [vmem:[#allocation5 + $0x1c8] sm:$0xf]
    %v226 = vld [vmem:[#allocation5 + $0x1cc] sm:$0xf]
    %v227 = vld [vmem:[#allocation5 + $0x1d0] sm:$0xf]
    %v228 = vld [vmem:[#allocation5 + $0x1d4] sm:$0xf]
    %v229 = vld [vmem:[#allocation5 + $0x1d8] sm:$0xf]
    %v230 = vld [vmem:[#allocation5 + $0x1dc] sm:$0xf]
    %v231 = vld [vmem:[#allocation5 + $0x1e0] sm:$0xf]
    %v232 = vld [vmem:[#allocation5 + $0x1e4] sm:$0xf]
    %v233 = vld [vmem:[#allocation5 + $0x1e8] sm:$0xf]
    %v234 = vld [vmem:[#allocation5 + $0x1ec] sm:$0xf]
    %v235 = vld [vmem:[#allocation5 + $0x1f0] sm:$0xf]
    %v236 = vld [vmem:[#allocation5 + $0x1f4] sm:$0xf]
    %v237 = vld [vmem:[#allocation5 + $0x1f8] sm:$0xf]
    %v238 = vld [vmem:[#allocation5 + $0x1fc] sm:$0xf]
    %v239 = vld [vmem:[%s2] sm:$0x1]
    %v241 = vlaneseq
    %v242 = vshrl.u32 %v241, 7
    %v243 = vsub.s32 0, %v242
    %v244 = vrot.slane %v239, %v243
    %v254 = vunpack.c.l.b16 %v103
    %v255 = vunpack.c.h.b16 %v103
    %v256 = vunpack.c.l.b16 %v104
    %v257 = vunpack.c.h.b16 %v104
    %v258 = vunpack.c.l.b16 %v105
    %v259 = vunpack.c.h.b16 %v105
    %v260 = vunpack.c.l.b16 %v106
    %v261 = vunpack.c.h.b16 %v106
    %v262 = vunpack.c.l.b16 %v107
    %v263 = vunpack.c.h.b16 %v107
    %v264 = vunpack.c.l.b16 %v108
    %v265 = vunpack.c.h.b16 %v108
    %v266 = vunpack.c.l.b16 %v109
    %v267 = vunpack.c.h.b16 %v109
    %v268 = vunpack.c.l.b16 %v110
    %v269 = vunpack.c.h.b16 %v110
    %v270 = vpack.c.b16 %v262, %v254
    %v271 = vpack.c.b16 %v263, %v255
    %v272 = vpack.c.b16 %v264, %v256
    %v273 = vpack.c.b16 %v265, %v257
    %v274 = vpack.c.b16 %v266, %v258
    %v275 = vpack.c.b16 %v267, %v259
    %v276 = vpack.c.b16 %v268, %v260
    %v277 = vpack.c.b16 %v269, %v261
    %v414 = vunpack.c.l.b16 %v111
    %v415 = vunpack.c.l.b16 %v112
    %v416 = vunpack.c.l.b16 %v113
    %v417 = vunpack.c.l.b16 %v114
    %v418 = vunpack.c.l.b16 %v115
    %v419 = vunpack.c.l.b16 %v116
    %v420 = vunpack.c.l.b16 %v117
    %v421 = vunpack.c.l.b16 %v118
    %v422 = vunpack.c.l.b16 %v119
    %v423 = vunpack.c.l.b16 %v120
    %v424 = vunpack.c.l.b16 %v121
    %v425 = vunpack.c.l.b16 %v122
    %v426 = vunpack.c.l.b16 %v123
    %v427 = vunpack.c.l.b16 %v124
    %v428 = vunpack.c.l.b16 %v125
    %v429 = vunpack.c.l.b16 %v126
    %v430 = vunpack.c.l.b16 %v127
    %v431 = vunpack.c.l.b16 %v128
    %v432 = vunpack.c.l.b16 %v129
    %v433 = vunpack.c.l.b16 %v130
    %v434 = vunpack.c.l.b16 %v131
    %v435 = vunpack.c.l.b16 %v132
    %v436 = vunpack.c.l.b16 %v133
    %v437 = vunpack.c.l.b16 %v134
    %v438 = vunpack.c.l.b16 %v135
    %v439 = vunpack.c.l.b16 %v136
    %v440 = vunpack.c.l.b16 %v137
    %v441 = vunpack.c.l.b16 %v138
    %v442 = vunpack.c.l.b16 %v139
    %v443 = vunpack.c.l.b16 %v140
    %v444 = vunpack.c.l.b16 %v141
    %v445 = vunpack.c.l.b16 %v142
    %v446 = vunpack.c.l.b16 %v143
    %v447 = vunpack.c.l.b16 %v144
    %v448 = vunpack.c.l.b16 %v145
    %v449 = vunpack.c.l.b16 %v146
    %v450 = vunpack.c.l.b16 %v147
    %v451 = vunpack.c.l.b16 %v148
    %v452 = vunpack.c.l.b16 %v149
    %v453 = vunpack.c.l.b16 %v150
    %v454 = vunpack.c.l.b16 %v151
    %v455 = vunpack.c.l.b16 %v152
    %v456 = vunpack.c.l.b16 %v153
    %v457 = vunpack.c.l.b16 %v154
    %v458 = vunpack.c.l.b16 %v155
    %v459 = vunpack.c.l.b16 %v156
    %v460 = vunpack.c.l.b16 %v157
    %v461 = vunpack.c.l.b16 %v158
    %v462 = vunpack.c.l.b16 %v159
    %v463 = vunpack.c.l.b16 %v160
    %v464 = vunpack.c.l.b16 %v161
    %v465 = vunpack.c.l.b16 %v162
    %v466 = vunpack.c.l.b16 %v163
    %v467 = vunpack.c.l.b16 %v164
    %v468 = vunpack.c.l.b16 %v165
    %v469 = vunpack.c.l.b16 %v166
    %v470 = vunpack.c.l.b16 %v167
    %v471 = vunpack.c.l.b16 %v168
    %v472 = vunpack.c.l.b16 %v169
    %v473 = vunpack.c.l.b16 %v170
    %v474 = vunpack.c.l.b16 %v171
    %v475 = vunpack.c.l.b16 %v172
    %v476 = vunpack.c.l.b16 %v173
    %v477 = vunpack.c.l.b16 %v174
    %v478 = vunpack.c.l.b16 %v175
    %v479 = vunpack.c.l.b16 %v176
    %v480 = vunpack.c.l.b16 %v177
    %v481 = vunpack.c.l.b16 %v178
    %v482 = vunpack.c.l.b16 %v179
    %v483 = vunpack.c.l.b16 %v180
    %v484 = vunpack.c.l.b16 %v181
    %v485 = vunpack.c.l.b16 %v182
    %v486 = vunpack.c.l.b16 %v183
    %v487 = vunpack.c.l.b16 %v184
    %v488 = vunpack.c.l.b16 %v185
    %v489 = vunpack.c.l.b16 %v186
    %v490 = vunpack.c.l.b16 %v187
    %v491 = vunpack.c.l.b16 %v188
    %v492 = vunpack.c.l.b16 %v189
    %v493 = vunpack.c.l.b16 %v190
    %v494 = vunpack.c.l.b16 %v191
    %v495 = vunpack.c.l.b16 %v192
    %v496 = vunpack.c.l.b16 %v193
    %v497 = vunpack.c.l.b16 %v194
    %v498 = vunpack.c.l.b16 %v195
    %v499 = vunpack.c.l.b16 %v196
    %v500 = vunpack.c.l.b16 %v197
    %v501 = vunpack.c.l.b16 %v198
    %v502 = vunpack.c.l.b16 %v199
    %v503 = vunpack.c.l.b16 %v200
    %v504 = vunpack.c.l.b16 %v201
    %v505 = vunpack.c.l.b16 %v202
    %v506 = vunpack.c.l.b16 %v203
    %v507 = vunpack.c.l.b16 %v204
    %v508 = vunpack.c.l.b16 %v205
    %v509 = vunpack.c.l.b16 %v206
    %v510 = vunpack.c.l.b16 %v207
    %v511 = vunpack.c.l.b16 %v208
    %v512 = vunpack.c.l.b16 %v209
    %v513 = vunpack.c.l.b16 %v210
    %v514 = vunpack.c.l.b16 %v211
    %v515 = vunpack.c.l.b16 %v212
    %v516 = vunpack.c.l.b16 %v213
    %v517 = vunpack.c.l.b16 %v214
    %v518 = vunpack.c.l.b16 %v215
    %v519 = vunpack.c.l.b16 %v216
    %v520 = vunpack.c.l.b16 %v217
    %v521 = vunpack.c.l.b16 %v218
    %v522 = vunpack.c.l.b16 %v219
    %v523 = vunpack.c.l.b16 %v220
    %v524 = vunpack.c.l.b16 %v221
    %v525 = vunpack.c.l.b16 %v222
    %v526 = vunpack.c.l.b16 %v223
    %v527 = vunpack.c.l.b16 %v224
    %v528 = vunpack.c.l.b16 %v225
    %v529 = vunpack.c.l.b16 %v226
    %v530 = vunpack.c.l.b16 %v227
    %v531 = vunpack.c.l.b16 %v228
    %v532 = vunpack.c.l.b16 %v229
    %v533 = vunpack.c.l.b16 %v230
    %v534 = vunpack.c.l.b16 %v231
    %v535 = vunpack.c.l.b16 %v232
    %v536 = vunpack.c.l.b16 %v233
    %v537 = vunpack.c.l.b16 %v234
    %v538 = vunpack.c.l.b16 %v235
    %v539 = vunpack.c.l.b16 %v236
    %v540 = vunpack.c.l.b16 %v237
    %v541 = vunpack.c.l.b16 %v238
    %v542 = vpack.c.b16 %v415, %v414
    %v543 = vpack.c.b16 %v417, %v416
    %v544 = vpack.c.b16 %v419, %v418
    %v545 = vpack.c.b16 %v421, %v420
    %v546 = vpack.c.b16 %v423, %v422
    %v547 = vpack.c.b16 %v425, %v424
    %v548 = vpack.c.b16 %v427, %v426
    %v549 = vpack.c.b16 %v429, %v428
    %v550 = vpack.c.b16 %v431, %v430
    %v551 = vpack.c.b16 %v433, %v432
    %v552 = vpack.c.b16 %v435, %v434
    %v553 = vpack.c.b16 %v437, %v436
    %v554 = vpack.c.b16 %v439, %v438
    %v555 = vpack.c.b16 %v441, %v440
    %v556 = vpack.c.b16 %v443, %v442
    %v557 = vpack.c.b16 %v445, %v444
    %v558 = vpack.c.b16 %v447, %v446
    %v559 = vpack.c.b16 %v449, %v448
    %v560 = vpack.c.b16 %v451, %v450
    %v561 = vpack.c.b16 %v453, %v452
    %v562 = vpack.c.b16 %v455, %v454
    %v563 = vpack.c.b16 %v457, %v456
    %v564 = vpack.c.b16 %v459, %v458
    %v565 = vpack.c.b16 %v461, %v460
    %v566 = vpack.c.b16 %v463, %v462
    %v567 = vpack.c.b16 %v465, %v464
    %v568 = vpack.c.b16 %v467, %v466
    %v569 = vpack.c.b16 %v469, %v468
    %v570 = vpack.c.b16 %v471, %v470
    %v571 = vpack.c.b16 %v473, %v472
    %v572 = vpack.c.b16 %v475, %v474
    %v573 = vpack.c.b16 %v477, %v476
    %v574 = vpack.c.b16 %v479, %v478
    %v575 = vpack.c.b16 %v481, %v480
    %v576 = vpack.c.b16 %v483, %v482
    %v577 = vpack.c.b16 %v485, %v484
    %v578 = vpack.c.b16 %v487, %v486
    %v579 = vpack.c.b16 %v489, %v488
    %v580 = vpack.c.b16 %v491, %v490
    %v581 = vpack.c.b16 %v493, %v492
    %v582 = vpack.c.b16 %v495, %v494
    %v583 = vpack.c.b16 %v497, %v496
    %v584 = vpack.c.b16 %v499, %v498
    %v585 = vpack.c.b16 %v501, %v500
    %v586 = vpack.c.b16 %v503, %v502
    %v587 = vpack.c.b16 %v505, %v504
    %v588 = vpack.c.b16 %v507, %v506
    %v589 = vpack.c.b16 %v509, %v508
    %v590 = vpack.c.b16 %v511, %v510
    %v591 = vpack.c.b16 %v513, %v512
    %v592 = vpack.c.b16 %v515, %v514
    %v593 = vpack.c.b16 %v517, %v516
    %v594 = vpack.c.b16 %v519, %v518
    %v595 = vpack.c.b16 %v521, %v520
    %v596 = vpack.c.b16 %v523, %v522
    %v597 = vpack.c.b16 %v525, %v524
    %v598 = vpack.c.b16 %v527, %v526
    %v599 = vpack.c.b16 %v529, %v528
    %v600 = vpack.c.b16 %v531, %v530
    %v601 = vpack.c.b16 %v533, %v532
    %v602 = vpack.c.b16 %v535, %v534
    %v603 = vpack.c.b16 %v537, %v536
    %v604 = vpack.c.b16 %v539, %v538
    %v605 = vpack.c.b16 %v541, %v540
    %670 = vmatprep.subr.bf16.mxu0 0
    %671 = vmatpush1.bf16.msra.mxu0 %v542
    %672 = vmatprep.subr.bf16.mxu0 0
    %673 = vmatpush1.bf16.msra.mxu0 %v543
    %674 = vmatprep.subr.bf16.mxu0 0
    %675 = vmatpush1.bf16.msra.mxu0 %v544
    %676 = vmatprep.subr.bf16.mxu0 0
    %677 = vmatpush1.bf16.msra.mxu0 %v545
    %678 = vmatprep.subr.bf16.mxu0 0
    %679 = vmatpush1.bf16.msra.mxu0 %v546
    %680 = vmatprep.subr.bf16.mxu0 0
    %681 = vmatpush1.bf16.msra.mxu0 %v547
    %682 = vmatprep.subr.bf16.mxu0 0
    %683 = vmatpush1.bf16.msra.mxu0 %v548
    %684 = vmatprep.subr.bf16.mxu0 0
    %685 = vmatpush1.bf16.msra.mxu0 %v549
    %686 = vmatprep.subr.bf16.mxu0 0
    %687 = vmatpush1.bf16.msra.mxu0 %v550
    %688 = vmatprep.subr.bf16.mxu0 0
    %689 = vmatpush1.bf16.msra.mxu0 %v551
    %690 = vmatprep.subr.bf16.mxu0 0
    %691 = vmatpush1.bf16.msra.mxu0 %v552
    %692 = vmatprep.subr.bf16.mxu0 0
    %693 = vmatpush1.bf16.msra.mxu0 %v553
    %694 = vmatprep.subr.bf16.mxu0 0
    %695 = vmatpush1.bf16.msra.mxu0 %v554
    %696 = vmatprep.subr.bf16.mxu0 0
    %697 = vmatpush1.bf16.msra.mxu0 %v555
    %698 = vmatprep.subr.bf16.mxu0 0
    %699 = vmatpush1.bf16.msra.mxu0 %v556
    %700 = vmatprep.subr.bf16.mxu0 0
    %701 = vmatpush1.bf16.msra.mxu0 %v557
    %702 = vmatprep.mubr.bf16.mxu0 %v271
    %703 = vmatmul.mubr.bf16.gmra.mrb[0].mxu0 %v270
    %v704 = vpop.f32.mrb[0].mxu0
    %v705 = vadd.f32 %v244, %v704
    %v706 = vpop.f32.mrb[0].mxu0
    %v707 = vpop.f32.mrb[0].mxu0
    %v708 = vadd.f32 %v244, %v707
    %v709 = vpop.f32.mrb[0].mxu0
    %710 = vdwg.mxu0
    %711 = vmatprep.subr.bf16.mxu0 0
    %712 = vmatpush1.bf16.msra.mxu0 %v558
    %713 = vmatprep.subr.bf16.mxu0 0
    %714 = vmatpush1.bf16.msra.mxu0 %v559
    %715 = vmatprep.subr.bf16.mxu0 0
    %716 = vmatpush1.bf16.msra.mxu0 %v560
    %717 = vmatprep.subr.bf16.mxu0 0
    %718 = vmatpush1.bf16.msra.mxu0 %v561
    %719 = vmatprep.subr.bf16.mxu0 0
    %720 = vmatpush1.bf16.msra.mxu0 %v562
    %721 = vmatprep.subr.bf16.mxu0 0
    %722 = vmatpush1.bf16.msra.mxu0 %v563
    %723 = vmatprep.subr.bf16.mxu0 0
    %724 = vmatpush1.bf16.msra.mxu0 %v564
    %725 = vmatprep.subr.bf16.mxu0 0
    %726 = vmatpush1.bf16.msra.mxu0 %v565
    %727 = vmatprep.subr.bf16.mxu0 0
    %728 = vmatpush1.bf16.msra.mxu0 %v566
    %729 = vmatprep.subr.bf16.mxu0 0
    %730 = vmatpush1.bf16.msra.mxu0 %v567
    %731 = vmatprep.subr.bf16.mxu0 0
    %732 = vmatpush1.bf16.msra.mxu0 %v568
    %733 = vmatprep.subr.bf16.mxu0 0
    %734 = vmatpush1.bf16.msra.mxu0 %v569
    %735 = vmatprep.subr.bf16.mxu0 0
    %736 = vmatpush1.bf16.msra.mxu0 %v570
    %737 = vmatprep.subr.bf16.mxu0 0
    %738 = vmatpush1.bf16.msra.mxu0 %v571
    %739 = vmatprep.subr.bf16.mxu0 0
    %740 = vmatpush1.bf16.msra.mxu0 %v572
    %741 = vmatprep.subr.bf16.mxu0 0
    %742 = vmatpush1.bf16.msra.mxu0 %v573
    %743 = vmatprep.mubr.bf16.mxu0 %v273
    %744 = vmatmul.mubr.bf16.gmra.mrb[0].mxu0 %v272
    %v745 = vpop.f32.mrb[0].mxu0
    %v746 = vadd.f32 %v705, %v745
    %v747 = vpop.f32.mrb[0].mxu0
    %v748 = vpop.f32.mrb[0].mxu0
    %v749 = vadd.f32 %v708, %v748
    %v750 = vpop.f32.mrb[0].mxu0
    %751 = vdwg.mxu0
    %752 = vmatprep.subr.bf16.mxu0 0
    %753 = vmatpush1.bf16.msra.mxu0 %v574
    %754 = vmatprep.subr.bf16.mxu0 0
    %755 = vmatpush1.bf16.msra.mxu0 %v575
    %756 = vmatprep.subr.bf16.mxu0 0
    %757 = vmatpush1.bf16.msra.mxu0 %v576
    %758 = vmatprep.subr.bf16.mxu0 0
    %759 = vmatpush1.bf16.msra.mxu0 %v577
    %760 = vmatprep.subr.bf16.mxu0 0
    %761 = vmatpush1.bf16.msra.mxu0 %v578
    %762 = vmatprep.subr.bf16.mxu0 0
    %763 = vmatpush1.bf16.msra.mxu0 %v579
    %764 = vmatprep.subr.bf16.mxu0 0
    %765 = vmatpush1.bf16.msra.mxu0 %v580
    %766 = vmatprep.subr.bf16.mxu0 0
    %767 = vmatpush1.bf16.msra.mxu0 %v581
    %768 = vmatprep.subr.bf16.mxu0 0
    %769 = vmatpush1.bf16.msra.mxu0 %v582
    %770 = vmatprep.subr.bf16.mxu0 0
    %771 = vmatpush1.bf16.msra.mxu0 %v583
    %772 = vmatprep.subr.bf16.mxu0 0
    %773 = vmatpush1.bf16.msra.mxu0 %v584
    %774 = vmatprep.subr.bf16.mxu0 0
    %775 = vmatpush1.bf16.msra.mxu0 %v585
    %776 = vmatprep.subr.bf16.mxu0 0
    %777 = vmatpush1.bf16.msra.mxu0 %v586
    %778 = vmatprep.subr.bf16.mxu0 0
    %779 = vmatpush1.bf16.msra.mxu0 %v587
    %780 = vmatprep.subr.bf16.mxu0 0
    %781 = vmatpush1.bf16.msra.mxu0 %v588
    %782 = vmatprep.subr.bf16.mxu0 0
    %783 = vmatpush1.bf16.msra.mxu0 %v589
    %784 = vmatprep.mubr.bf16.mxu0 %v275
    %785 = vmatmul.mubr.bf16.gmra.mrb[0].mxu0 %v274
    %v786 = vpop.f32.mrb[0].mxu0
    %v787 = vadd.f32 %v746, %v786
    %v788 = vpop.f32.mrb[0].mxu0
    %v789 = vpop.f32.mrb[0].mxu0
    %v790 = vadd.f32 %v749, %v789
    %v791 = vpop.f32.mrb[0].mxu0
    %792 = vdwg.mxu0
    %793 = vmatprep.subr.bf16.mxu0 0
    %794 = vmatpush1.bf16.msra.mxu0 %v590
    %795 = vmatprep.subr.bf16.mxu0 0
    %796 = vmatpush1.bf16.msra.mxu0 %v591
    %797 = vmatprep.subr.bf16.mxu0 0
    %798 = vmatpush1.bf16.msra.mxu0 %v592
    %799 = vmatprep.subr.bf16.mxu0 0
    %800 = vmatpush1.bf16.msra.mxu0 %v593
    %801 = vmatprep.subr.bf16.mxu0 0
    %802 = vmatpush1.bf16.msra.mxu0 %v594
    %803 = vmatprep.subr.bf16.mxu0 0
    %804 = vmatpush1.bf16.msra.mxu0 %v595
    %805 = vmatprep.subr.bf16.mxu0 0
    %806 = vmatpush1.bf16.msra.mxu0 %v596
    %807 = vmatprep.subr.bf16.mxu0 0
    %808 = vmatpush1.bf16.msra.mxu0 %v597
    %809 = vmatprep.subr.bf16.mxu0 0
    %810 = vmatpush1.bf16.msra.mxu0 %v598
    %811 = vmatprep.subr.bf16.mxu0 0
    %812 = vmatpush1.bf16.msra.mxu0 %v599
    %813 = vmatprep.subr.bf16.mxu0 0
    %814 = vmatpush1.bf16.msra.mxu0 %v600
    %815 = vmatprep.subr.bf16.mxu0 0
    %816 = vmatpush1.bf16.msra.mxu0 %v601
    %817 = vmatprep.subr.bf16.mxu0 0
    %818 = vmatpush1.bf16.msra.mxu0 %v602
    %819 = vmatprep.subr.bf16.mxu0 0
    %820 = vmatpush1.bf16.msra.mxu0 %v603
    %821 = vmatprep.subr.bf16.mxu0 0
    %822 = vmatpush1.bf16.msra.mxu0 %v604
    %823 = vmatprep.subr.bf16.mxu0 0
    %824 = vmatpush1.bf16.msra.mxu0 %v605
    %825 = vmatprep.mubr.bf16.mxu0 %v277
    %826 = vmatmul.mubr.bf16.gmra.mrb[0].mxu0 %v276
    %v827 = vpop.f32.mrb[0].mxu0
    %v828 = vadd.f32 %v787, %v827
    %v829 = vpop.f32.mrb[0].mxu0
    %v830 = vpop.f32.mrb[0].mxu0
    %v831 = vadd.f32 %v790, %v830
    %v832 = vpop.f32.mrb[0].mxu0
    %833 = vdwg.mxu0
    %v834 = vmax.f32 %v828, 0.0
    %v835 = vmax.f32 %v831, 0.0
    %v836 = vpack.c.bf16 %v835, %v834
    %v837 = vld [vmem:[#allocation7] sm:$0xf]
    %v838 = vld [vmem:[#allocation7 + $0x4] sm:$0xf]
    %v839 = vld [vmem:[#allocation7 + $0x8] sm:$0xf]
    %v840 = vld [vmem:[#allocation7 + $0xc] sm:$0xf]
    %v841 = vld [vmem:[#allocation7 + $0x10] sm:$0xf]
    %v842 = vld [vmem:[#allocation7 + $0x14] sm:$0xf]
    %v843 = vld [vmem:[#allocation7 + $0x18] sm:$0xf]
    %v844 = vld [vmem:[#allocation7 + $0x1c] sm:$0xf]
    %v845 = vld [vmem:[#allocation7 + $0x20] sm:$0xf]
    %v846 = vld [vmem:[#allocation7 + $0x24] sm:$0xf]
    %v847 = vld [vmem:[#allocation7 + $0x28] sm:$0xf]
    %v848 = vld [vmem:[#allocation7 + $0x2c] sm:$0xf]
    %v849 = vld [vmem:[#allocation7 + $0x30] sm:$0xf]
    %v850 = vld [vmem:[#allocation7 + $0x34] sm:$0xf]
    %v851 = vld [vmem:[#allocation7 + $0x38] sm:$0xf]
    %v852 = vld [vmem:[#allocation7 + $0x3c] sm:$0xf]
    %v853 = vld [vmem:[%s4] sm:$0x1]
    %v855 = vlaneseq
    %v856 = vshrl.u32 %v855, 7
    %v857 = vsub.s32 0, %v856
    %v858 = vrot.slane %v853, %v857
    %v876 = vunpack.c.l.b16 %v837
    %v877 = vunpack.c.l.b16 %v838
    %v878 = vunpack.c.l.b16 %v839
    %v879 = vunpack.c.l.b16 %v840
    %v880 = vunpack.c.l.b16 %v841
    %v881 = vunpack.c.l.b16 %v842
    %v882 = vunpack.c.l.b16 %v843
    %v883 = vunpack.c.l.b16 %v844
    %v884 = vunpack.c.l.b16 %v845
    %v885 = vunpack.c.l.b16 %v846
    %v886 = vunpack.c.l.b16 %v847
    %v887 = vunpack.c.l.b16 %v848
    %v888 = vunpack.c.l.b16 %v849
    %v889 = vunpack.c.l.b16 %v850
    %v890 = vunpack.c.l.b16 %v851
    %v891 = vunpack.c.l.b16 %v852
    %v892 = vpack.c.b16 %v877, %v876
    %v893 = vpack.c.b16 %v879, %v878
    %v894 = vpack.c.b16 %v881, %v880
    %v895 = vpack.c.b16 %v883, %v882
    %v896 = vpack.c.b16 %v885, %v884
    %v897 = vpack.c.b16 %v887, %v886
    %v898 = vpack.c.b16 %v889, %v888
    %v899 = vpack.c.b16 %v891, %v890
    %908 = vmatprep.subr.bf16.mxu0 0
    %909 = vmatpush1.bf16.msra.mxu0 %v892
    %910 = vmatprep.subr.bf16.mxu0 0
    %911 = vmatpush1.bf16.msra.mxu0 %v893
    %912 = vmatprep.subr.bf16.mxu0 0
    %913 = vmatpush1.bf16.msra.mxu0 %v894
    %914 = vmatprep.subr.bf16.mxu0 0
    %915 = vmatpush1.bf16.msra.mxu0 %v895
    %916 = vmatprep.subr.bf16.mxu0 0
    %917 = vmatpush1.bf16.msra.mxu0 %v896
    %918 = vmatprep.subr.bf16.mxu0 0
    %919 = vmatpush1.bf16.msra.mxu0 %v897
    %920 = vmatprep.subr.bf16.mxu0 0
    %921 = vmatpush1.bf16.msra.mxu0 %v898
    %922 = vmatprep.subr.bf16.mxu0 0
    %923 = vmatpush1.bf16.msra.mxu0 %v899
    %924 = vmatprep.subr.bf16.mxu0 0
    %925 = vmatpush1.bf16.msra.mxu0 0
    %926 = vmatprep.subr.bf16.mxu0 0
    %927 = vmatpush1.bf16.msra.mxu0 0
    %928 = vmatprep.subr.bf16.mxu0 0
    %929 = vmatpush1.bf16.msra.mxu0 0
    %930 = vmatprep.subr.bf16.mxu0 0
    %931 = vmatpush1.bf16.msra.mxu0 0
    %932 = vmatprep.subr.bf16.mxu0 0
    %933 = vmatpush1.bf16.msra.mxu0 0
    %934 = vmatprep.subr.bf16.mxu0 0
    %935 = vmatpush1.bf16.msra.mxu0 0
    %936 = vmatprep.subr.bf16.mxu0 0
    %937 = vmatpush1.bf16.msra.mxu0 0
    %938 = vmatprep.subr.bf16.mxu0 0
    %939 = vmatpush1.bf16.msra.mxu0 0
    %940 = vmatprep.mubr.bf16.mxu0 0
    %941 = vmatmul.mubr.bf16.gmra.mrb[0].mxu0 %v836
    %v942 = vpop.f32.mrb[0].mxu0
    %v943 = vadd.f32 %v858, %v942
    %v944 = vpop.f32.mrb[0].mxu0
    %v945 = vpop.f32.mrb[0].mxu0
    %v946 = vadd.f32 %v858, %v945
    %v947 = vpop.f32.mrb[0].mxu0
    %948 = vdwg.mxu0
    %v949 = vmax.f32 %v943, 0.0
    %v950 = vmax.f32 %v946, 0.0
    %v951 = vpack.c.bf16 %v950, %v949
    %v952 = vld [vmem:[#allocation8] sm:$0xf]
    %v953 = vld [vmem:[#allocation8 + $0x4] sm:$0xf]
    %v954 = vld [vmem:[#allocation8 + $0x8] sm:$0xf]
    %v955 = vld [vmem:[#allocation8 + $0xc] sm:$0xf]
    %v956 = vld [vmem:[#allocation8 + $0x10] sm:$0xf]
    %v957 = vld [vmem:[#allocation8 + $0x14] sm:$0xf]
    %v958 = vld [vmem:[#allocation8 + $0x18] sm:$0xf]
    %v959 = vld [vmem:[#allocation8 + $0x1c] sm:$0xf]
    %v960 = vld [vmem:[#allocation8 + $0x20] sm:$0xf]
    %v961 = vld [vmem:[#allocation8 + $0x24] sm:$0xf]
    %v962 = vld [vmem:[#allocation8 + $0x28] sm:$0xf]
    %v963 = vld [vmem:[#allocation8 + $0x2c] sm:$0xf]
    %v964 = vld [vmem:[#allocation8 + $0x30] sm:$0xf]
    %v965 = vld [vmem:[#allocation8 + $0x34] sm:$0xf]
    %v966 = vld [vmem:[#allocation8 + $0x38] sm:$0xf]
    %v967 = vld [vmem:[#allocation8 + $0x3c] sm:$0xf]
    %v968 = vld [vmem:[%s6] sm:$0x1]
    %v970 = vlaneseq
    %v971 = vshrl.u32 %v970, 7
    %v972 = vsub.s32 0, %v971
    %v973 = vrot.slane %v968, %v972
    %v991 = vunpack.c.l.b16 %v952
    %v992 = vunpack.c.l.b16 %v953
    %v993 = vunpack.c.l.b16 %v954
    %v994 = vunpack.c.l.b16 %v955
    %v995 = vunpack.c.l.b16 %v956
    %v996 = vunpack.c.l.b16 %v957
    %v997 = vunpack.c.l.b16 %v958
    %v998 = vunpack.c.l.b16 %v959
    %v999 = vunpack.c.l.b16 %v960
    %v1000 = vunpack.c.l.b16 %v961
    %v1001 = vunpack.c.l.b16 %v962
    %v1002 = vunpack.c.l.b16 %v963
    %v1003 = vunpack.c.l.b16 %v964
    %v1004 = vunpack.c.l.b16 %v965
    %v1005 = vunpack.c.l.b16 %v966
    %v1006 = vunpack.c.l.b16 %v967
    %v1007 = vpack.c.b16 %v992, %v991
    %v1008 = vpack.c.b16 %v994, %v993
    %v1009 = vpack.c.b16 %v996, %v995
    %v1010 = vpack.c.b16 %v998, %v997
    %v1011 = vpack.c.b16 %v1000, %v999
    %v1012 = vpack.c.b16 %v1002, %v1001
    %v1013 = vpack.c.b16 %v1004, %v1003
    %v1014 = vpack.c.b16 %v1006, %v1005
    %1023 = vmatprep.subr.bf16.mxu0 0
    %1024 = vmatpush1.bf16.msra.mxu0 %v1007
    %1025 = vmatprep.subr.bf16.mxu0 0
    %1026 = vmatpush1.bf16.msra.mxu0 %v1008
    %1027 = vmatprep.subr.bf16.mxu0 0
    %1028 = vmatpush1.bf16.msra.mxu0 %v1009
    %1029 = vmatprep.subr.bf16.mxu0 0
    %1030 = vmatpush1.bf16.msra.mxu0 %v1010
    %1031 = vmatprep.subr.bf16.mxu0 0
    %1032 = vmatpush1.bf16.msra.mxu0 %v1011
    %1033 = vmatprep.subr.bf16.mxu0 0
    %1034 = vmatpush1.bf16.msra.mxu0 %v1012
    %1035 = vmatprep.subr.bf16.mxu0 0
    %1036 = vmatpush1.bf16.msra.mxu0 %v1013
    %1037 = vmatprep.subr.bf16.mxu0 0
    %1038 = vmatpush1.bf16.msra.mxu0 %v1014
    %1039 = vmatprep.subr.bf16.mxu0 0
    %1040 = vmatpush1.bf16.msra.mxu0 0
    %1041 = vmatprep.subr.bf16.mxu0 0
    %1042 = vmatpush1.bf16.msra.mxu0 0
    %1043 = vmatprep.subr.bf16.mxu0 0
    %1044 = vmatpush1.bf16.msra.mxu0 0
    %1045 = vmatprep.subr.bf16.mxu0 0
    %1046 = vmatpush1.bf16.msra.mxu0 0
    %1047 = vmatprep.subr.bf16.mxu0 0
    %1048 = vmatpush1.bf16.msra.mxu0 0
    %1049 = vmatprep.subr.bf16.mxu0 0
    %1050 = vmatpush1.bf16.msra.mxu0 0
    %1051 = vmatprep.subr.bf16.mxu0 0
    %1052 = vmatpush1.bf16.msra.mxu0 0
    %1053 = vmatprep.subr.bf16.mxu0 0
    %1054 = vmatpush1.bf16.msra.mxu0 0
    %1055 = vmatprep.mubr.bf16.mxu0 0
    %1056 = vmatmul.mubr.bf16.gmra.mrb[0].mxu0 %v951
    %v1057 = vpop.f32.mrb[0].mxu0
    %v1058 = vadd.f32 %v973, %v1057
    %v1059 = vpop.f32.mrb[0].mxu0
    %v1060 = vpop.f32.mrb[0].mxu0
    %v1061 = vadd.f32 %v973, %v1060
    %v1062 = vpop.f32.mrb[0].mxu0
    %1063 = vdwg.mxu0
    %v1064 = vmax.f32 %v1058, 0.0
    %v1065 = vmax.f32 %v1061, 0.0
    %v1066 = vpack.c.bf16 %v1065, %v1064
    %v1067 = vld [vmem:[#allocation10] sm:$0xf]
    %v1068 = vld [vmem:[#allocation10 + $0x4] sm:$0xf]
    %v1069 = vld [vmem:[#allocation10 + $0x8] sm:$0xf]
    %v1070 = vld [vmem:[#allocation10 + $0xc] sm:$0xf]
    %v1071 = vld [vmem:[#allocation10 + $0x10] sm:$0xf]
    %v1072 = vld [vmem:[#allocation10 + $0x14] sm:$0xf]
    %v1073 = vld [vmem:[#allocation10 + $0x18] sm:$0xf]
    %v1074 = vld [vmem:[#allocation10 + $0x1c] sm:$0xf]
    %v1075 = vld [vmem:[#allocation10 + $0x20] sm:$0xf]
    %v1076 = vld [vmem:[#allocation10 + $0x24] sm:$0xf]
    %v1077 = vld [vmem:[#allocation10 + $0x28] sm:$0xf]
    %v1078 = vld [vmem:[#allocation10 + $0x2c] sm:$0xf]
    %v1079 = vld [vmem:[#allocation10 + $0x30] sm:$0xf]
    %v1080 = vld [vmem:[#allocation10 + $0x34] sm:$0xf]
    %v1081 = vld [vmem:[#allocation10 + $0x38] sm:$0xf]
    %v1082 = vld [vmem:[#allocation10 + $0x3c] sm:$0xf]
    %v1099 = vunpack.c.l.b16 %v1067
    %v1100 = vunpack.c.l.b16 %v1068
    %v1101 = vunpack.c.l.b16 %v1069
    %v1102 = vunpack.c.l.b16 %v1070
    %v1103 = vunpack.c.l.b16 %v1071
    %v1104 = vunpack.c.l.b16 %v1072
    %v1105 = vunpack.c.l.b16 %v1073
    %v1106 = vunpack.c.l.b16 %v1074
    %v1107 = vunpack.c.l.b16 %v1075
    %v1108 = vunpack.c.l.b16 %v1076
    %v1109 = vunpack.c.l.b16 %v1077
    %v1110 = vunpack.c.l.b16 %v1078
    %v1111 = vunpack.c.l.b16 %v1079
    %v1112 = vunpack.c.l.b16 %v1080
    %v1113 = vunpack.c.l.b16 %v1081
    %v1114 = vunpack.c.l.b16 %v1082
    %v1115 = vpack.c.b16 %v1100, %v1099
    %v1116 = vpack.c.b16 %v1102, %v1101
    %v1117 = vpack.c.b16 %v1104, %v1103
    %v1118 = vpack.c.b16 %v1106, %v1105
    %v1119 = vpack.c.b16 %v1108, %v1107
    %v1120 = vpack.c.b16 %v1110, %v1109
    %v1121 = vpack.c.b16 %v1112, %v1111
    %v1122 = vpack.c.b16 %v1114, %v1113
    %1131 = vmatprep.subr.bf16.mxu0 0
    %1132 = vmatpush1.bf16.msra.mxu0 %v1115
    %1133 = vmatprep.subr.bf16.mxu0 0
    %1134 = vmatpush1.bf16.msra.mxu0 %v1116
    %1135 = vmatprep.subr.bf16.mxu0 0
    %1136 = vmatpush1.bf16.msra.mxu0 %v1117
    %1137 = vmatprep.subr.bf16.mxu0 0
    %1138 = vmatpush1.bf16.msra.mxu0 %v1118
    %1139 = vmatprep.subr.bf16.mxu0 0
    %1140 = vmatpush1.bf16.msra.mxu0 %v1119
    %1141 = vmatprep.subr.bf16.mxu0 0
    %1142 = vmatpush1.bf16.msra.mxu0 %v1120
    %1143 = vmatprep.subr.bf16.mxu0 0
    %1144 = vmatpush1.bf16.msra.mxu0 %v1121
    %1145 = vmatprep.subr.bf16.mxu0 0
    %1146 = vmatpush1.bf16.msra.mxu0 %v1122
    %1147 = vmatprep.subr.bf16.mxu0 0
    %1148 = vmatpush1.bf16.msra.mxu0 0
    %1149 = vmatprep.subr.bf16.mxu0 0
    %1150 = vmatpush1.bf16.msra.mxu0 0
    %1151 = vmatprep.subr.bf16.mxu0 0
    %1152 = vmatpush1.bf16.msra.mxu0 0
    %1153 = vmatprep.subr.bf16.mxu0 0
    %1154 = vmatpush1.bf16.msra.mxu0 0
    %1155 = vmatprep.subr.bf16.mxu0 0
    %1156 = vmatpush1.bf16.msra.mxu0 0
    %1157 = vmatprep.subr.bf16.mxu0 0
    %1158 = vmatpush1.bf16.msra.mxu0 0
    %1159 = vmatprep.subr.bf16.mxu0 0
    %1160 = vmatpush1.bf16.msra.mxu0 0
    %1161 = vmatprep.subr.bf16.mxu0 0
    %1162 = vmatpush1.bf16.msra.mxu0 0
    %1163 = vmatprep.mubr.bf16.mxu0 0
    %1164 = vmatmul.mubr.bf16.gmra.mrb[0].mxu0 %v1066
    %v1165 = vpop.f32.mrb[0].mxu0
    %v1166 = vadd.f32 0.0, %v1165
    %v1167 = vpop.f32.mrb[0].mxu0
    %v1168 = vpop.f32.mrb[0].mxu0
    %v1169 = vadd.f32 0.0, %v1168
    %v1170 = vpop.f32.mrb[0].mxu0
    %1171 = vdwg.mxu0
    %v1172 = vld [vmem:[#allocation2] sm:$0x1]
    %v1174 = vlaneseq
    %v1175 = vshrl.u32 %v1174, 7
    %v1176 = vsub.s32 0, %v1175
    %v1177 = vrot.slane %v1172, %v1176
    %v1179 = vadd.f32 %v1166, %v1177
    %v1180 = vadd.f32 %v1169, %v1177
    %v1181 = vxor.u32 %v1179, 2147483648
    %v1182 = vxor.u32 %v1180, 2147483648
    %v1183 = vmul.f32 %v1181, 1.442695
    %v1184 = vpow.pop %v1183
    %v1185 = vmul.f32 %v1182, 1.442695
    %v1186 = vpow.pop %v1185
    %v1187 = vadd.f32 %v1184, 1.0
    %v1188 = vadd.f32 %v1186, 1.0
    %v1189 = vrcp.pop %v1187
    %v1190 = vmul.f32 1.0, %v1189
    %v1191 = vrcp.pop %v1188
    %v1192 = vmul.f32 1.0, %v1191
    %vm1193 = vcmask 7168
    %1194 = vst.msk [vmem:[%s9] sm:$0xff] %vm1193, %v1190
    %1195 = vst.msk [vmem:[%s9 + $0x8] sm:$0xff] %vm1193, %v1192
    // Predicated region
    $region58: #{tpu_custom_call.1} parent=1 // pred_check
      _
    $region59: #{tpu_custom_call.1} parent=1 // pred_check_branch
      %1197 = sbr.rel (0) target = $region61
    $region60: #{tpu_custom_call.1} parent=1 // pred_region
      _
    $region61: #{tpu_custom_call.1} parent=1 // pred_fallthru
      _
    // Predicated region
    $region62: #{tpu_custom_call.1} parent=1 // pred_check
      _
    $region63: #{tpu_custom_call.1} parent=1 // pred_check_branch
      %1199 = sbr.rel (0) target = $region65
    $region64: #{tpu_custom_call.1} parent=1 // pred_region
      _
    $region65: #{tpu_custom_call.1} parent=1 // pred_fallthru
      _
    %1200 = vsyncpa [#allocation4], 1
    %1201 = vsyncpa [#allocation6], 1
    %1202 = vsyncpa [#allocation9], 1

</llo_original>
